<compile_context>
chip_gen: v6e
topology: v6e:2x2x1
jax: 0.10.0
libtpu: 0.0.40
codegen_flags: <defaults>
</compile_context>

<pallas_src>
import functools

import jax
import jax.numpy as jnp
from jax import lax
from jax.experimental import pallas as pl
from jax.experimental.pallas import tpu as pltpu

# --- "module parameters" (from __init__, deterministic, no checkpoint) ---------------
LANGUAGE_LOSS_WEIGHT = 1.0
DIVERSITY_LOSS_WEIGHT = 0.1
CONTRASTIVE_LOSS_WEIGHT = 0.05
CONSISTENCY_LOSS_WEIGHT = 0.01
TEMPERATURE = 0.07
IGNORE_INDEX = -100

# Tile caps (conservative so 2 buffers x block stays far under even v7x's 64 MiB VMEM).
_SEQ_TILE_CAP = 256      # rows per block
_VOCAB_FULL_CAP = 4096   # keep the whole vocab in one block if it is at most this
_VOCAB_TILE_CAP = 2048   # otherwise tile the vocab (multiple of 128)


# ======================= Kernel 1: language cross-entropy ===========================
def _lang_ce_kernel(logits_ref, labels_ref, loss_ref, valid_ref,
                    m_sc, l_sc, ll_sc, *, vocab_size):
    """Online-logsumexp masked CE.  Grid = (B, n_seq_tiles, n_vocab_tiles)."""
    v_idx = pl.program_id(2)

    @pl.when(v_idx == 0)
    def _():
        m_sc[...] = jnp.full(m_sc.shape, -jnp.inf, jnp.float32)
        l_sc[...] = jnp.zeros(l_sc.shape, jnp.float32)
        ll_sc[...] = jnp.zeros(ll_sc.shape, jnp.float32)

    logits = logits_ref[0].astype(jnp.float32)        # [TS, TV] (upcast in-register)
    labels = labels_ref[0]                            # [TS, 1]  int32
    ts, tv = logits.shape

    # Global vocab column index of each element of this block.
    col = v_idx * tv + lax.broadcasted_iota(jnp.int32, (ts, tv), 1)
    in_vocab = col < vocab_size                       # mask padded vocab columns (edge block)
    x = jnp.where(in_vocab, logits, -jnp.inf)

    # Online logsumexp update.
    m_prev = m_sc[...]
    m_new = jnp.maximum(m_prev, jnp.max(x, axis=-1, keepdims=True))
    corr = jnp.exp(m_prev - m_new)
    l_sc[...] = l_sc[...] * corr + jnp.sum(jnp.exp(x - m_new), axis=-1, keepdims=True)
    m_sc[...] = m_new

    # Accumulate the label logit (one-hot select; IGNORE_INDEX never matches a column).
    ll_sc[...] = ll_sc[...] + jnp.sum(
        jnp.where(col == labels, logits, 0.0), axis=-1, keepdims=True)

    @pl.when(v_idx == pl.num_programs(2) - 1)
    def _():
        lse = m_sc[...] + jnp.log(l_sc[...])          # [TS, 1]
        valid = labels != IGNORE_INDEX                # padded / last-position rows excluded
        loss_ref[0] = jnp.where(valid, lse - ll_sc[...], 0.0)
        valid_ref[0] = valid.astype(jnp.float32)


def language_loss(logits, target_ids):
    """CrossEntropyLoss(ignore_index)(logits[:, :-1].reshape(-1, V), target_ids[:, 1:].reshape(-1))."""
    B, S, V = logits.shape

    ts = S if S <= _SEQ_TILE_CAP else _SEQ_TILE_CAP
    tv = V if V <= _VOCAB_FULL_CAP else _VOCAB_TILE_CAP
    n_seq = pl.cdiv(S - 1, ts)
    n_voc = pl.cdiv(V, tv)
    sp = n_seq * ts

    # The causal shift lives in the *labels* only (4 bytes/token); the big logits tensor
    # is consumed in its original [B, S, V] layout and native dtype.  Rows whose label is
    # IGNORE_INDEX (including logits position S-1 and any seq-tile padding) drop out.
    labels = target_ids[:, 1:].astype(jnp.int32)
    labels = jnp.pad(labels, ((0, 0), (0, sp - (S - 1))), constant_values=IGNORE_INDEX)
    labels = labels.reshape(B, sp, 1)

    kernel = functools.partial(_lang_ce_kernel, vocab_size=V)

    loss_rows, valid_rows = pl.pallas_call(
        kernel,
        out_shape=(
            jax.ShapeDtypeStruct((B, sp, 1), jnp.float32),
            jax.ShapeDtypeStruct((B, sp, 1), jnp.float32),
        ),
        grid_spec=pltpu.PrefetchScalarGridSpec(
            num_scalar_prefetch=0,
            grid=(B, n_seq, n_voc),
            in_specs=[
                pl.BlockSpec((1, ts, tv), lambda b, s, v: (b, s, v)),   # logits block
                pl.BlockSpec((1, ts, 1), lambda b, s, v: (b, s, 0)),    # shifted labels
            ],
            out_specs=[
                pl.BlockSpec((1, ts, 1), lambda b, s, v: (b, s, 0)),    # per-row loss
                pl.BlockSpec((1, ts, 1), lambda b, s, v: (b, s, 0)),    # per-row validity
            ],
            scratch_shapes=[
                pltpu.VMEM((ts, 1), jnp.float32),   # running max
                pltpu.VMEM((ts, 1), jnp.float32),   # running sum(exp)
                pltpu.VMEM((ts, 1), jnp.float32),   # label logit accumulator
            ],
        ),
        compiler_params=pltpu.CompilerParams(
            dimension_semantics=("parallel", "parallel", "arbitrary"),
            vmem_limit_bytes=48 * 1024 * 1024,
        ),
        cost_estimate=pl.CostEstimate(
            flops=5 * B * (S - 1) * V,
            transcendentals=B * (S - 1) * V,
            bytes_accessed=B * S * V * logits.dtype.itemsize + 2 * B * S * 4,
        ),
    )(logits, labels)

    # Mean over non-ignored targets (matches nn.CrossEntropyLoss; 0/0 -> NaN like torch).
    return jnp.sum(loss_rows) / jnp.sum(valid_rows)


# ========= Kernel 2: fused diversity (entropy) + consistency (var) + contrastive =====
def _aux_kernel(alpha_ref, vis_ref, txt_ref, out_ref):
    # --- diversity & consistency over alpha ---
    a = alpha_ref[...]                                     # [B, T] f32
    eps = 1e-8
    ent = -(a * jnp.log(a + eps) + (1.0 - a) * jnp.log(1.0 - a + eps))
    n = a.shape[0] * a.shape[1]
    out_ref[0] = -jnp.sum(ent) / n                         # -mean(entropy)
    mean = jnp.sum(a) / n
    d = a - mean
    out_ref[1] = jnp.sum(d * d) / (n - 1)                  # torch.var default (unbiased)

    # --- contrastive: mean-pool, L2-normalize, symmetric InfoNCE ---
    vis = vis_ref[...]                                     # [B, T, D] f32
    txt = txt_ref[...]                                     # [B, D]    f32
    b, t, _ = vis.shape
    feps = 1e-12                                           # F.normalize eps

    vp = jnp.sum(vis, axis=1) / t                          # mean pool -> [B, D]
    vn = vp / jnp.maximum(jnp.sqrt(jnp.sum(vp * vp, axis=-1, keepdims=True)), feps)
    tn = txt / jnp.maximum(jnp.sqrt(jnp.sum(txt * txt, axis=-1, keepdims=True)), feps)

    # Contract feature axis of both operands directly (no explicit transpose of tn).
    sim = lax.dot_general(vn, tn, (((1,), (1,)), ((), ())),
                          preferred_element_type=jnp.float32) / TEMPERATURE   # [B, B]

    eye = (lax.broadcasted_iota(jnp.int32, (b, b), 0)
           == lax.broadcasted_iota(jnp.int32, (b, b), 1))
    diag = jnp.where(eye, sim, 0.0)                        # computed once, reused
    diag_r = jnp.sum(diag, axis=1, keepdims=True)          # [B, 1]
    diag_c = jnp.sum(diag, axis=0, keepdims=True)          # [1, B]

    m_r = jnp.max(sim, axis=1, keepdims=True)
    lse_r = m_r + jnp.log(jnp.sum(jnp.exp(sim - m_r), axis=1, keepdims=True))
    m_c = jnp.max(sim, axis=0, keepdims=True)
    lse_c = m_c + jnp.log(jnp.sum(jnp.exp(sim - m_c), axis=0, keepdims=True))

    loss_v2t = jnp.sum(lse_r - diag_r) / b                 # CE(sim,   arange(B))
    loss_t2v = jnp.sum(lse_c - diag_c) / b                 # CE(sim.T, arange(B))
    out_ref[2] = 0.5 * (loss_v2t + loss_t2v)


def aux_losses(alpha, fused_tokens, text_embeddings):
    """Returns (diversity_loss, consistency_loss, contrastive_loss) from one kernel launch."""
    a2d = alpha.reshape(alpha.shape[0], -1).astype(jnp.float32)    # [B, T]
    out = pl.pallas_call(
        _aux_kernel,
        out_shape=jax.ShapeDtypeStruct((3,), jnp.float32),
        in_specs=[
            pl.BlockSpec(memory_space=pltpu.MemorySpace.VMEM),
            pl.BlockSpec(memory_space=pltpu.MemorySpace.VMEM),
            pl.BlockSpec(memory_space=pltpu.MemorySpace.VMEM),
        ],
        out_specs=pl.BlockSpec(memory_space=pltpu.MemorySpace.SMEM),
    )(a2d, fused_tokens.astype(jnp.float32), text_embeddings.astype(jnp.float32))
    return out[0], out[1], out[2]


# ================================ full forward =======================================
@jax.jit
def dual_vision_loss(logits, target_ids, alpha, fused_tokens, text_embeddings):
    """Equivalent of DualVisionLoss.forward with has_images=True and 'intermediates' present."""
    lang = language_loss(logits, target_ids)
    div, cons, contr = aux_losses(alpha, fused_tokens, text_embeddings)
    total = (LANGUAGE_LOSS_WEIGHT * lang
             + DIVERSITY_LOSS_WEIGHT * div
             + CONTRASTIVE_LOSS_WEIGHT * contr
             + CONSISTENCY_LOSS_WEIGHT * cons)
    return total


# =============================== pure-JAX reference ==================================
def _reference(logits, target_ids, alpha, fused_tokens, text_embeddings):
    B, S, V = logits.shape
    sl = logits[:, :-1, :].reshape(-1, V).astype(jnp.float32)
    lbl = target_ids[:, 1:].reshape(-1)
    lse = jax.nn.logsumexp(sl, axis=-1)
    picked = jnp.take_along_axis(sl, jnp.maximum(lbl, 0)[:, None], axis=-1)[:, 0]
    valid = lbl != IGNORE_INDEX
    lang = jnp.sum(jnp.where(valid, lse - picked, 0.0)) / jnp.sum(valid)

    a = alpha.astype(jnp.float32)
    eps = 1e-8
    ent = -(a * jnp.log(a + eps) + (1 - a) * jnp.log(1 - a + eps))
    div = -jnp.mean(ent)
    cons = jnp.var(a, ddof=1)

    vp = fused_tokens.astype(jnp.float32).mean(axis=1)
    vn = vp / jnp.maximum(jnp.linalg.norm(vp, axis=-1, keepdims=True), 1e-12)
    tn = text_embeddings.astype(jnp.float32)
    tn = tn / jnp.maximum(jnp.linalg.norm(tn, axis=-1, keepdims=True), 1e-12)
    sim = vn @ tn.T / TEMPERATURE

    def ce(s):
        idx = jnp.arange(s.shape[0])
        return jnp.mean(jax.nn.logsumexp(s, axis=-1) - s[idx, idx])

    contr = 0.5 * (ce(sim) + ce(sim.T))
    return (LANGUAGE_LOSS_WEIGHT * lang + DIVERSITY_LOSS_WEIGHT * div
            + CONTRASTIVE_LOSS_WEIGHT * contr + CONSISTENCY_LOSS_WEIGHT * cons)


if __name__ == "__main__":
    key = jax.random.PRNGKey(0)
    kl, kt, ka, kf, ke = jax.random.split(key, 5)

    B, S, V = 2, 8, 128      # batch, seq, vocab
    T, D = 16, 32            # vision tokens, embed dim

    logits = jax.random.normal(kl, (B, S, V), dtype=jnp.float32)
    target_ids = jax.random.randint(kt, (B, S), 0, V, dtype=jnp.int32)
    # sprinkle some ignore_index entries (padding)
    target_ids = target_ids.at[0, -1].set(IGNORE_INDEX).at[1, -2:].set(IGNORE_INDEX)

    alpha = jax.nn.sigmoid(jax.random.normal(ka, (B, T, 1), dtype=jnp.float32))
    fused_tokens = jax.random.normal(kf, (B, T, D), dtype=jnp.float32)
    text_embeddings = jax.random.normal(ke, (B, D), dtype=jnp.float32)

    total = dual_vision_loss(logits, target_ids, alpha, fused_tokens, text_embeddings)
    total = jax.block_until_ready(total)
    ref = _reference(logits, target_ids, alpha, fused_tokens, text_embeddings)

    assert jnp.isfinite(total), total
    assert jnp.allclose(total, ref, rtol=1e-3, atol=1e-3), (total, ref)
    print("KERNEL_OK")
</pallas_src>

<mosaic_0001>
module attributes {stable_mosaic.version = 11 : i64} {
  func.func @_lang_ce_kernel(%arg0: i32, %arg1: i32, %arg2: i32, %arg3: memref<1x8x128xf32, #tpu.memory_space<vmem>>, %arg4: memref<1x8x1xi32, #tpu.memory_space<vmem>>, %arg5: memref<1x8x1xf32, #tpu.memory_space<vmem>>, %arg6: memref<1x8x1xf32, #tpu.memory_space<vmem>>, %arg7: memref<8x1xf32, #tpu.memory_space<vmem>>, %arg8: memref<8x1xf32, #tpu.memory_space<vmem>>, %arg9: memref<8x1xf32, #tpu.memory_space<vmem>>) attributes {dimension_semantics = [#tpu.dimension_semantics<parallel>, #tpu.dimension_semantics<parallel>, #tpu.dimension_semantics<arbitrary>], iteration_bounds = array<i64: 2, 1, 1>, scalar_prefetch = 0 : i64, scratch_operands = 3 : i64, tpu.core_type = #tpu.core_type<tc>, window_params = [{transform_indices = @transform_0, window_bounds = array<i64: 1, 8, 128>}, {transform_indices = @transform_1, window_bounds = array<i64: 1, 8, 1>}, {transform_indices = @transform_2, window_bounds = array<i64: 1, 8, 1>}, {transform_indices = @transform_3, window_bounds = array<i64: 1, 8, 1>}]} {
    %c0_i32 = arith.constant 0 : i32
    %0 = arith.cmpi eq, %arg2, %c0_i32 : i32
    %1 = arith.extui %0 : i1 to i32
    %c0_i32_0 = arith.constant 0 : i32
    %2 = arith.cmpi ne, %1, %c0_i32_0 : i32
    scf.if %2 {
      %cst_25 = arith.constant 0xFF800000 : f32
      %43 = vector.broadcast %cst_25 : f32 to vector<8x1xf32>
      %c0_26 = arith.constant 0 : index
      %c0_27 = arith.constant 0 : index
      %44 = vector.load %arg7[%c0_26, %c0_27] : memref<8x1xf32, #tpu.memory_space<vmem>>, vector<8x1xf32>
      tpu.vector_store %arg7[%c0_26, %c0_27], %43 {strides = array<i32>} : memref<8x1xf32, #tpu.memory_space<vmem>>, vector<8x1xf32>,
      %cst_28 = arith.constant 0.000000e+00 : f32
      %45 = vector.broadcast %cst_28 : f32 to vector<8x1xf32>
      %c0_29 = arith.constant 0 : index
      %c0_30 = arith.constant 0 : index
      %46 = vector.load %arg8[%c0_29, %c0_30] : memref<8x1xf32, #tpu.memory_space<vmem>>, vector<8x1xf32>
      tpu.vector_store %arg8[%c0_29, %c0_30], %45 {strides = array<i32>} : memref<8x1xf32, #tpu.memory_space<vmem>>, vector<8x1xf32>,
      %cst_31 = arith.constant 0.000000e+00 : f32
      %47 = vector.broadcast %cst_31 : f32 to vector<8x1xf32>
      %c0_32 = arith.constant 0 : index
      %c0_33 = arith.constant 0 : index
      %48 = vector.load %arg9[%c0_32, %c0_33] : memref<8x1xf32, #tpu.memory_space<vmem>>, vector<8x1xf32>
      tpu.vector_store %arg9[%c0_32, %c0_33], %47 {strides = array<i32>} : memref<8x1xf32, #tpu.memory_space<vmem>>, vector<8x1xf32>,
    } else {
    }
    %c0 = arith.constant 0 : index
    %c0_1 = arith.constant 0 : index
    %c0_2 = arith.constant 0 : index
    %3 = vector.load %arg3[%c0, %c0_1, %c0_2] : memref<1x8x128xf32, #tpu.memory_space<vmem>>, vector<1x8x128xf32>
    %4 = vector.shape_cast %3 : vector<1x8x128xf32> to vector<8x128xf32>
    %c0_3 = arith.constant 0 : index
    %c0_4 = arith.constant 0 : index
    %c0_5 = arith.constant 0 : index
    %5 = vector.load %arg4[%c0_3, %c0_4, %c0_5] : memref<1x8x1xi32, #tpu.memory_space<vmem>>, vector<1x8x1xi32>
    %6 = vector.shape_cast %5 : vector<1x8x1xi32> to vector<8x1xi32>
    %c128_i32 = arith.constant 128 : i32
    %7 = arith.muli %arg2, %c128_i32 : i32
    %8 = tpu.iota {dimensions = array<i32: 1>} : vector<8x128xi32>
    %9 = vector.broadcast %7 : i32 to vector<8x128xi32>
    %10 = arith.addi %9, %8 : vector<8x128xi32>
    %c128_i32_6 = arith.constant 128 : i32
    %11 = vector.broadcast %c128_i32_6 : i32 to vector<8x128xi32>
    %12 = arith.cmpi slt, %10, %11 : vector<8x128xi32>
    %cst = arith.constant 0xFF800000 : f32
    %13 = vector.broadcast %cst : f32 to vector<8x128xf32>
    %14 = arith.select %12, %4, %13 : vector<8x128xi1>, vector<8x128xf32>
    %c0_7 = arith.constant 0 : index
    %c0_8 = arith.constant 0 : index
    %15 = vector.load %arg7[%c0_7, %c0_8] : memref<8x1xf32, #tpu.memory_space<vmem>>, vector<8x1xf32>
    %cst_9 = arith.constant dense<0xFF800000> : vector<8xf32>
    %16 = vector.multi_reduction <maximumf>, %14, %cst_9 [1] : vector<8x128xf32> to vector<8xf32>
    %17 = vector.shape_cast %16 : vector<8xf32> to vector<8x1xf32>
    %18 = arith.maximumf %15, %17 : vector<8x1xf32>
    %19 = arith.subf %15, %18 : vector<8x1xf32>
    %20 = math.exp %19 : vector<8x1xf32>
    %c0_10 = arith.constant 0 : index
    %c0_11 = arith.constant 0 : index
    %21 = vector.load %arg8[%c0_10, %c0_11] : memref<8x1xf32, #tpu.memory_space<vmem>>, vector<8x1xf32>
    %22 = arith.mulf %21, %20 : vector<8x1xf32>
    %23 = vector.broadcast %18 : vector<8x1xf32> to vector<8x128xf32>
    %24 = arith.subf %14, %23 : vector<8x128xf32>
    %25 = math.exp %24 : vector<8x128xf32>
    %cst_12 = arith.constant dense<0.000000e+00> : vector<8xf32>
    %26 = vector.multi_reduction <add>, %25, %cst_12 [1] : vector<8x128xf32> to vector<8xf32>
    %27 = vector.shape_cast %26 : vector<8xf32> to vector<8x1xf32>
    %28 = arith.addf %22, %27 : vector<8x1xf32>
    %c0_13 = arith.constant 0 : index
    %c0_14 = arith.constant 0 : index
    %29 = vector.load %arg8[%c0_13, %c0_14] : memref<8x1xf32, #tpu.memory_space<vmem>>, vector<8x1xf32>
    tpu.vector_store %arg8[%c0_13, %c0_14], %28 {strides = array<i32>} : memref<8x1xf32, #tpu.memory_space<vmem>>, vector<8x1xf32>,
    %c0_15 = arith.constant 0 : index
    %c0_16 = arith.constant 0 : index
    %30 = vector.load %arg7[%c0_15, %c0_16] : memref<8x1xf32, #tpu.memory_space<vmem>>, vector<8x1xf32>
    tpu.vector_store %arg7[%c0_15, %c0_16], %18 {strides = array<i32>} : memref<8x1xf32, #tpu.memory_space<vmem>>, vector<8x1xf32>,
    %c0_17 = arith.constant 0 : index
    %c0_18 = arith.constant 0 : index
    %31 = vector.load %arg9[%c0_17, %c0_18] : memref<8x1xf32, #tpu.memory_space<vmem>>, vector<8x1xf32>
    %32 = vector.broadcast %6 : vector<8x1xi32> to vector<8x128xi32>
    %33 = arith.cmpi eq, %10, %32 : vector<8x128xi32>
    %cst_19 = arith.constant 0.000000e+00 : f32
    %34 = vector.broadcast %cst_19 : f32 to vector<8x128xf32>
    %35 = arith.select %33, %4, %34 : vector<8x128xi1>, vector<8x128xf32>
    %cst_20 = arith.constant dense<0.000000e+00> : vector<8xf32>
    %36 = vector.multi_reduction <add>, %35, %cst_20 [1] : vector<8x128xf32> to vector<8xf32>
    %37 = vector.shape_cast %36 : vector<8xf32> to vector<8x1xf32>
    %38 = arith.addf %31, %37 : vector<8x1xf32>
    %c0_21 = arith.constant 0 : index
    %c0_22 = arith.constant 0 : index
    %39 = vector.load %arg9[%c0_21, %c0_22] : memref<8x1xf32, #tpu.memory_space<vmem>>, vector<8x1xf32>
    tpu.vector_store %arg9[%c0_21, %c0_22], %38 {strides = array<i32>} : memref<8x1xf32, #tpu.memory_space<vmem>>, vector<8x1xf32>,
    %c0_i32_23 = arith.constant 0 : i32
    %40 = arith.cmpi eq, %arg2, %c0_i32_23 : i32
    %41 = arith.extui %40 : i1 to i32
    %c0_i32_24 = arith.constant 0 : i32
    %42 = arith.cmpi ne, %41, %c0_i32_24 : i32
    scf.if %42 {
      %c0_25 = arith.constant 0 : index
      %c0_26 = arith.constant 0 : index
      %43 = vector.load %arg7[%c0_25, %c0_26] : memref<8x1xf32, #tpu.memory_space<vmem>>, vector<8x1xf32>
      %c0_27 = arith.constant 0 : index
      %c0_28 = arith.constant 0 : index
      %44 = vector.load %arg8[%c0_27, %c0_28] : memref<8x1xf32, #tpu.memory_space<vmem>>, vector<8x1xf32>
      %45 = math.log %44 : vector<8x1xf32>
      %46 = arith.addf %43, %45 : vector<8x1xf32>
      %c-100_i32 = arith.constant -100 : i32
      %47 = vector.broadcast %c-100_i32 : i32 to vector<8x1xi32>
      %48 = arith.cmpi ne, %6, %47 : vector<8x1xi32>
      %c0_29 = arith.constant 0 : index
      %c0_30 = arith.constant 0 : index
      %49 = vector.load %arg9[%c0_29, %c0_30] : memref<8x1xf32, #tpu.memory_space<vmem>>, vector<8x1xf32>
      %50 = arith.subf %46, %49 : vector<8x1xf32>
      %cst_31 = arith.constant 0.000000e+00 : f32
      %51 = vector.broadcast %cst_31 : f32 to vector<8x1xf32>
      %52 = arith.select %48, %50, %51 : vector<8x1xi1>, vector<8x1xf32>
      %c0_32 = arith.constant 0 : index
      %c0_33 = arith.constant 0 : index
      %c0_34 = arith.constant 0 : index
      %53 = vector.load %arg5[%c0_32, %c0_33, %c0_34] : memref<1x8x1xf32, #tpu.memory_space<vmem>>, vector<1x8x1xf32>
      %54 = vector.shape_cast %53 : vector<1x8x1xf32> to vector<8x1xf32>
      %55 = vector.shape_cast %52 : vector<8x1xf32> to vector<1x8x1xf32>
      tpu.vector_store %arg5[%c0_32, %c0_33, %c0_34], %55 {strides = array<i32>} : memref<1x8x1xf32, #tpu.memory_space<vmem>>, vector<1x8x1xf32>,
      %56 = arith.extui %48 : vector<8x1xi1> to vector<8x1xi32>
      %57 = arith.sitofp %56 : vector<8x1xi32> to vector<8x1xf32>
      %c0_35 = arith.constant 0 : index
      %c0_36 = arith.constant 0 : index
      %c0_37 = arith.constant 0 : index
      %58 = vector.load %arg6[%c0_35, %c0_36, %c0_37] : memref<1x8x1xf32, #tpu.memory_space<vmem>>, vector<1x8x1xf32>
      %59 = vector.shape_cast %58 : vector<1x8x1xf32> to vector<8x1xf32>
      %60 = vector.shape_cast %57 : vector<8x1xf32> to vector<1x8x1xf32>
      tpu.vector_store %arg6[%c0_35, %c0_36, %c0_37], %60 {strides = array<i32>} : memref<1x8x1xf32, #tpu.memory_space<vmem>>, vector<1x8x1xf32>,
    } else {
    }
    return
  }
  func.func @transform_0(%arg0: i32, %arg1: i32, %arg2: i32) -> (i32, i32, i32) {
    %c0_i32 = arith.constant 0 : i32
    return %arg0, %arg1, %arg2 : i32, i32, i32
  }
  func.func @transform_1(%arg0: i32, %arg1: i32, %arg2: i32) -> (i32, i32, i32) {
    %c0_i32 = arith.constant 0 : i32
    %c0_i32_0 = arith.constant 0 : i32
    return %arg0, %arg1, %c0_i32 : i32, i32, i32
  }
  func.func @transform_2(%arg0: i32, %arg1: i32, %arg2: i32) -> (i32, i32, i32) {
    %c0_i32 = arith.constant 0 : i32
    %c0_i32_0 = arith.constant 0 : i32
    return %arg0, %arg1, %c0_i32 : i32, i32, i32
  }
  func.func @transform_3(%arg0: i32, %arg1: i32, %arg2: i32) -> (i32, i32, i32) {
    %c0_i32 = arith.constant 0 : i32
    %c0_i32_0 = arith.constant 0 : i32
    return %arg0, %arg1, %c0_i32 : i32, i32, i32
  }
}

module attributes {stable_mosaic.version = 11 : i64} {
  func.func @_aux_kernel(%arg0: memref<2x16xf32, #tpu.memory_space<vmem>>, %arg1: memref<2x16x32xf32, #tpu.memory_space<vmem>>, %arg2: memref<2x32xf32, #tpu.memory_space<vmem>>, %arg3: memref<3xf32, #tpu.memory_space<smem>>) attributes {dimension_semantics = [], scalar_prefetch = 0 : i64, scratch_operands = 0 : i64, tpu.core_type = #tpu.core_type<tc>} {
    %c0 = arith.constant 0 : index
    %c0_0 = arith.constant 0 : index
    %0 = vector.load %arg0[%c0, %c0_0] : memref<2x16xf32, #tpu.memory_space<vmem>>, vector<2x16xf32>
    %cst = arith.constant 9.99999993E-9 : f32
    %1 = vector.broadcast %cst : f32 to vector<2x16xf32>
    %2 = arith.addf %0, %1 : vector<2x16xf32>
    %3 = math.log %2 : vector<2x16xf32>
    %4 = arith.mulf %0, %3 : vector<2x16xf32>
    %cst_1 = arith.constant 1.000000e+00 : f32
    %5 = vector.broadcast %cst_1 : f32 to vector<2x16xf32>
    %6 = arith.subf %5, %0 : vector<2x16xf32>
    %cst_2 = arith.constant 1.000000e+00 : f32
    %7 = vector.broadcast %cst_2 : f32 to vector<2x16xf32>
    %8 = arith.subf %7, %0 : vector<2x16xf32>
    %cst_3 = arith.constant 9.99999993E-9 : f32
    %9 = vector.broadcast %cst_3 : f32 to vector<2x16xf32>
    %10 = arith.addf %8, %9 : vector<2x16xf32>
    %11 = math.log %10 : vector<2x16xf32>
    %12 = arith.mulf %6, %11 : vector<2x16xf32>
    %13 = arith.addf %4, %12 : vector<2x16xf32>
    %cst_4 = arith.constant 0.000000e+00 : f32
    %14 = vector.broadcast %cst_4 : f32 to vector<2x16xf32>
    %15 = arith.subf %14, %13 : vector<2x16xf32>
    %16 = vector.shape_cast %15 : vector<2x16xf32> to vector<1x2x16xf32>
    %cst_5 = arith.constant dense<0.000000e+00> : vector<1xf32>
    %17 = vector.multi_reduction <add>, %16, %cst_5 [1, 2] : vector<1x2x16xf32> to vector<1xf32>
    %18 = vector.shape_cast %17 : vector<1xf32> to vector<1x1x1xf32>
    %19 = vector.extract %18[0, 0, 0] : f32 from vector<1x1x1xf32>
    %cst_6 = arith.constant 0.000000e+00 : f32
    %20 = arith.subf %cst_6, %19 : f32
    %cst_7 = arith.constant 3.200000e+01 : f32
    %21 = arith.divf %20, %cst_7 : f32
    %c0_8 = arith.constant 0 : index
    %22 = memref.load %arg3[%c0_8] : memref<3xf32, #tpu.memory_space<smem>>
    memref.store %21, %arg3[%c0_8] : memref<3xf32, #tpu.memory_space<smem>>
    %23 = vector.shape_cast %0 : vector<2x16xf32> to vector<1x2x16xf32>
    %cst_9 = arith.constant dense<0.000000e+00> : vector<1xf32>
    %24 = vector.multi_reduction <add>, %23, %cst_9 [1, 2] : vector<1x2x16xf32> to vector<1xf32>
    %25 = vector.shape_cast %24 : vector<1xf32> to vector<1x1x1xf32>
    %26 = vector.extract %25[0, 0, 0] : f32 from vector<1x1x1xf32>
    %cst_10 = arith.constant 3.200000e+01 : f32
    %27 = arith.divf %26, %cst_10 : f32
    %28 = vector.broadcast %27 : f32 to vector<2x16xf32>
    %29 = arith.subf %0, %28 : vector<2x16xf32>
    %30 = arith.mulf %29, %29 : vector<2x16xf32>
    %31 = vector.shape_cast %30 : vector<2x16xf32> to vector<1x2x16xf32>
    %cst_11 = arith.constant dense<0.000000e+00> : vector<1xf32>
    %32 = vector.multi_reduction <add>, %31, %cst_11 [1, 2] : vector<1x2x16xf32> to vector<1xf32>
    %33 = vector.shape_cast %32 : vector<1xf32> to vector<1x1x1xf32>
    %34 = vector.extract %33[0, 0, 0] : f32 from vector<1x1x1xf32>
    %cst_12 = arith.constant 3.100000e+01 : f32
    %35 = arith.divf %34, %cst_12 : f32
    %c1 = arith.constant 1 : index
    %36 = memref.load %arg3[%c1] : memref<3xf32, #tpu.memory_space<smem>>
    memref.store %35, %arg3[%c1] : memref<3xf32, #tpu.memory_space<smem>>
    %c0_13 = arith.constant 0 : index
    %c0_14 = arith.constant 0 : index
    %c0_15 = arith.constant 0 : index
    %37 = vector.load %arg1[%c0_13, %c0_14, %c0_15] : memref<2x16x32xf32, #tpu.memory_space<vmem>>, vector<2x16x32xf32>
    %c0_16 = arith.constant 0 : index
    %c0_17 = arith.constant 0 : index
    %38 = vector.load %arg2[%c0_16, %c0_17] : memref<2x32xf32, #tpu.memory_space<vmem>>, vector<2x32xf32>
    %cst_18 = arith.constant dense<0.000000e+00> : vector<2x32xf32>
    %39 = vector.multi_reduction <add>, %37, %cst_18 [1] : vector<2x16x32xf32> to vector<2x32xf32>
    %cst_19 = arith.constant 1.600000e+01 : f32
    %40 = vector.broadcast %cst_19 : f32 to vector<2x32xf32>
    %41 = arith.divf %39, %40 : vector<2x32xf32>
    %42 = arith.mulf %41, %41 : vector<2x32xf32>
    %cst_20 = arith.constant dense<0.000000e+00> : vector<2xf32>
    %43 = vector.multi_reduction <add>, %42, %cst_20 [1] : vector<2x32xf32> to vector<2xf32>
    %44 = vector.shape_cast %43 : vector<2xf32> to vector<2x1xf32>
    %45 = math.sqrt %44 : vector<2x1xf32>
    %cst_21 = arith.constant 9.99999996E-13 : f32
    %46 = vector.broadcast %cst_21 : f32 to vector<2x1xf32>
    %47 = arith.maximumf %45, %46 : vector<2x1xf32>
    %48 = vector.broadcast %47 : vector<2x1xf32> to vector<2x32xf32>
    %49 = arith.divf %41, %48 : vector<2x32xf32>
    %50 = arith.mulf %38, %38 : vector<2x32xf32>
    %cst_22 = arith.constant dense<0.000000e+00> : vector<2xf32>
    %51 = vector.multi_reduction <add>, %50, %cst_22 [1] : vector<2x32xf32> to vector<2xf32>
    %52 = vector.shape_cast %51 : vector<2xf32> to vector<2x1xf32>
    %53 = math.sqrt %52 : vector<2x1xf32>
    %cst_23 = arith.constant 9.99999996E-13 : f32
    %54 = vector.broadcast %cst_23 : f32 to vector<2x1xf32>
    %55 = arith.maximumf %53, %54 : vector<2x1xf32>
    %56 = vector.broadcast %55 : vector<2x1xf32> to vector<2x32xf32>
    %57 = arith.divf %38, %56 : vector<2x32xf32>
    %cst_24 = arith.constant dense<0.000000e+00> : vector<2x2xf32>
    %58 = tpu.matmul %49, %57, %cst_24 {dimension_numbers = #tpu.dot_dimension_numbers<[1], [1], [0], [0], [0, 0, 1, 0], [], []>} : vector<2x32xf32>, vector<2x32xf32>, vector<2x2xf32> -> vector<2x2xf32>
    %cst_25 = arith.constant 7.000000e-02 : f32
    %59 = vector.broadcast %cst_25 : f32 to vector<2x2xf32>
    %60 = arith.divf %58, %59 : vector<2x2xf32>
    %61 = tpu.iota {dimensions = array<i32: 0>} : vector<2x2xi32>
    %62 = tpu.iota {dimensions = array<i32: 1>} : vector<2x2xi32>
    %63 = arith.cmpi eq, %61, %62 : vector<2x2xi32>
    %cst_26 = arith.constant 0.000000e+00 : f32
    %64 = vector.broadcast %cst_26 : f32 to vector<2x2xf32>
    %65 = arith.select %63, %60, %64 : vector<2x2xi1>, vector<2x2xf32>
    %cst_27 = arith.constant dense<0.000000e+00> : vector<2xf32>
    %66 = vector.multi_reduction <add>, %65, %cst_27 [1] : vector<2x2xf32> to vector<2xf32>
    %67 = vector.shape_cast %66 : vector<2xf32> to vector<2x1xf32>
    %cst_28 = arith.constant dense<0.000000e+00> : vector<2xf32>
    %68 = vector.multi_reduction <add>, %65, %cst_28 [0] : vector<2x2xf32> to vector<2xf32>
    %69 = vector.shape_cast %68 : vector<2xf32> to vector<1x2xf32>
    %cst_29 = arith.constant dense<0xFF800000> : vector<2xf32>
    %70 = vector.multi_reduction <maximumf>, %60, %cst_29 [1] : vector<2x2xf32> to vector<2xf32>
    %71 = vector.shape_cast %70 : vector<2xf32> to vector<2x1xf32>
    %72 = vector.broadcast %71 : vector<2x1xf32> to vector<2x2xf32>
    %73 = arith.subf %60, %72 : vector<2x2xf32>
    %74 = math.exp %73 : vector<2x2xf32>
    %cst_30 = arith.constant dense<0.000000e+00> : vector<2xf32>
    %75 = vector.multi_reduction <add>, %74, %cst_30 [1] : vector<2x2xf32> to vector<2xf32>
    %76 = vector.shape_cast %75 : vector<2xf32> to vector<2x1xf32>
    %77 = math.log %76 : vector<2x1xf32>
    %78 = arith.addf %71, %77 : vector<2x1xf32>
    %cst_31 = arith.constant dense<0xFF800000> : vector<2xf32>
    %79 = vector.multi_reduction <maximumf>, %60, %cst_31 [0] : vector<2x2xf32> to vector<2xf32>
    %80 = vector.shape_cast %79 : vector<2xf32> to vector<1x2xf32>
    %81 = vector.broadcast %80 : vector<1x2xf32> to vector<2x2xf32>
    %82 = arith.subf %60, %81 : vector<2x2xf32>
    %83 = math.exp %82 : vector<2x2xf32>
    %cst_32 = arith.constant dense<0.000000e+00> : vector<2xf32>
    %84 = vector.multi_reduction <add>, %83, %cst_32 [0] : vector<2x2xf32> to vector<2xf32>
    %85 = vector.shape_cast %84 : vector<2xf32> to vector<1x2xf32>
    %86 = math.log %85 : vector<1x2xf32>
    %87 = arith.addf %80, %86 : vector<1x2xf32>
    %88 = arith.subf %78, %67 : vector<2x1xf32>
    %89 = vector.shape_cast %88 : vector<2x1xf32> to vector<1x2x1xf32>
    %cst_33 = arith.constant dense<0.000000e+00> : vector<1xf32>
    %90 = vector.multi_reduction <add>, %89, %cst_33 [1, 2] : vector<1x2x1xf32> to vector<1xf32>
    %91 = vector.shape_cast %90 : vector<1xf32> to vector<1x1x1xf32>
    %92 = vector.extract %91[0, 0, 0] : f32 from vector<1x1x1xf32>
    %cst_34 = arith.constant 2.000000e+00 : f32
    %93 = arith.divf %92, %cst_34 : f32
    %94 = arith.subf %87, %69 : vector<1x2xf32>
    %95 = vector.shape_cast %94 : vector<1x2xf32> to vector<1x1x2xf32>
    %cst_35 = arith.constant dense<0.000000e+00> : vector<1xf32>
    %96 = vector.multi_reduction <add>, %95, %cst_35 [1, 2] : vector<1x1x2xf32> to vector<1xf32>
    %97 = vector.shape_cast %96 : vector<1xf32> to vector<1x1x1xf32>
    %98 = vector.extract %97[0, 0, 0] : f32 from vector<1x1x1xf32>
    %cst_36 = arith.constant 2.000000e+00 : f32
    %99 = arith.divf %98, %cst_36 : f32
    %100 = arith.addf %93, %99 : f32
    %cst_37 = arith.constant 5.000000e-01 : f32
    %101 = arith.mulf %cst_37, %100 : f32
    %c2 = arith.constant 2 : index
    %102 = memref.load %arg3[%c2] : memref<3xf32, #tpu.memory_space<smem>>
    memref.store %101, %arg3[%c2] : memref<3xf32, #tpu.memory_space<smem>>
    return
  }
}

</mosaic_0001>

<llo_original>
// kernel: dual_vision_loss.2
$region0: #{dual_vision_loss.2}
  #allocation0 [shape = 'u32[]', space=smem, size = 0x4, offset = 0x4, fixed_abs, tag = 'smem constant byte address 0x4 - core index']
  #allocation1 [shape = 'u32[144,128]{1,0:T(1,128)}', space=vmem, size = 0x12000, scoped, tag = 'internal scratch']
  #allocation2 [shape = 'f32[8,1]{1,0:T(8,128)}', space=vmem, size = 0x1000, scoped, tag = 'scratch operand']
  #allocation3 [shape = 'f32[8,1]{1,0:T(8,128)}', space=vmem, size = 0x1000, scoped, tag = 'scratch operand']
  #allocation4 [shape = 'f32[8,1]{1,0:T(8,128)}', space=vmem, size = 0x1000, scoped, tag = 'scratch operand']
  %s0 = inlined_call_operand.vmem [shape: f32[2,8,128], index: 0, kind: input, shape index: {}]
  %s1 = inlined_call_operand.vmem [shape: s32[2,8,1], index: 1, kind: input, shape index: {}]
  %s2 = inlined_call_operand.vmem [shape: f32[2,8,1], index: 2, kind: output, shape index: {0}]
  %s3 = inlined_call_operand.vmem [shape: f32[2,8,1], index: 3, kind: output, shape index: {1}]
  %4 = xla_tuple %s2, %s3
  %s5 = sld [smem:[#allocation0]]
  $region57: #{dual_vision_loss.2} parent=0
    _
  %s7 = ssub.s32 1, %s5
  %s8 = scalar_select 0, %s7, %s5
  loop: start=0, step=1, limit=4
  $region2: #{dual_vision_loss.2} parent=0 // loop_pre_header
    _
  $region3: #{dual_vision_loss.2} parent=0 // loop_header
    %s10 = sphi 0, %s14
    %p11 = scmp.ge.s32.totalorder %s10, 4
    %s17 = sphi 0, %s36
    %s18 = sphi 0, %s32
    %s19 = sphi 0, %s28
    %s20 = sphi 0, %s17
    %s21 = sphi 0, %s18
    %s22 = sphi 0, %s19
    %s23 = sphi 0, %s20
    %s24 = sphi 0, %s21
    %s25 = sphi 0, %s22
    %s43 = sphi 0, %s45
    %s46 = sphi 0, %s43
    %s47 = sphi 0, %s46
    %s63 = sphi 0, %s47
    %s71 = sphi 0, %s73
    %s74 = sphi 0, %s71
    %s75 = sphi 0, %s74
    %s91 = sphi 0, %s75
    %s99 = sphi 0, %s101
    %s102 = sphi 0, %s99
    %s103 = sphi 0, %s102
    %s119 = sphi 0, %s103
    %s127 = sphi 0, %s129
    %s130 = sphi 0, %s127
    %s131 = sphi 0, %s130
    %s147 = sphi 0, %s131
  $region4: #{dual_vision_loss.2} parent=0 // loop_header_branch
    %13 = sbr.rel (%p11) target = $region8
  $region5: #{dual_vision_loss.2} parent=0 // loop_body
    %s15 = ssub.s32 %s10, 1
    %s16 = ssub.s32 %s10, 2
    %s26 = sadd.s32 1, %s19
    %p27 = scmp.ge.s32.totalorder %s26, 1
    %s28 = scalar_select %p27, 0, %s26
    %s29 = sadd.s32 1, %s18
    %s30 = scalar_select %p27, %s29, %s18
    %p31 = scmp.ge.s32.totalorder %s30, 1
    %s32 = scalar_select %p31, 0, %s30
    %s33 = sadd.s32 1, %s17
    %s34 = scalar_select %p31, %s33, %s17
    %p35 = scmp.ge.s32.totalorder %s34, 2
    %s36 = scalar_select %p35, 0, %s34
    %s37 = ssub.s32 %s17, %s36
    %s38 = ssub.s32 %s18, %s32
    %s39 = sor.u32 %s37, %s38
    %s40 = ssub.s32 %s19, %s28
    %s41 = sor.u32 %s39, %s40
    %p42 = scmp.eq.s32.totalorder %s41, 0
    %s44 = sadd.s32 %s43, 1
    %s45 = scalar_select %p42, %s43, %s44
    %p48 = pneg %p42
    %p49 = scmp.eq.s32.totalorder %s10, 1
    %p50 = por %p48, %p49
    %p51 = scmp.ne.s32.totalorder %s43, %s46
    %p52 = scmp.eq.s32.totalorder %s10, 0
    %p53 = por %p51, %p52
    %p54 = scmp.ne.s32.totalorder %s43, %s46
    %p55 = scmp.eq.s32.totalorder %s15, 1
    %p56 = por %p54, %p55
    %p57 = scmp.ne.s32.totalorder %s46, %s47
    %p58 = scmp.eq.s32.totalorder %s15, 0
    %p59 = por %p57, %p58
    %p60 = scmp.ne.s32.totalorder %s46, %s47
    %p61 = scmp.eq.s32.totalorder %s16, 1
    %p62 = por %p60, %p61
    %p64 = scmp.ne.s32.totalorder %s47, %s63
    %p65 = scmp.eq.s32.totalorder %s16, 0
    %p66 = por %p64, %p65
    %s67 = ssub.s32 %s17, %s36
    %s68 = ssub.s32 %s18, %s32
    %s69 = sor.u32 %s67, %s68
    %p70 = scmp.eq.s32.totalorder %s69, 0
    %s72 = sadd.s32 %s71, 1
    %s73 = scalar_select %p70, %s71, %s72
    %p76 = pneg %p70
    %p77 = scmp.eq.s32.totalorder %s10, 1
    %p78 = por %p76, %p77
    %p79 = scmp.ne.s32.totalorder %s71, %s74
    %p80 = scmp.eq.s32.totalorder %s10, 0
    %p81 = por %p79, %p80
    %p82 = scmp.ne.s32.totalorder %s71, %s74
    %p83 = scmp.eq.s32.totalorder %s15, 1
    %p84 = por %p82, %p83
    %p85 = scmp.ne.s32.totalorder %s74, %s75
    %p86 = scmp.eq.s32.totalorder %s15, 0
    %p87 = por %p85, %p86
    %p88 = scmp.ne.s32.totalorder %s74, %s75
    %p89 = scmp.eq.s32.totalorder %s16, 1
    %p90 = por %p88, %p89
    %p92 = scmp.ne.s32.totalorder %s75, %s91
    %p93 = scmp.eq.s32.totalorder %s16, 0
    %p94 = por %p92, %p93
    %s95 = ssub.s32 %s17, %s36
    %s96 = ssub.s32 %s18, %s32
    %s97 = sor.u32 %s95, %s96
    %p98 = scmp.eq.s32.totalorder %s97, 0
    %s100 = sadd.s32 %s99, 1
    %s101 = scalar_select %p98, %s99, %s100
    %p104 = pneg %p98
    %p105 = scmp.eq.s32.totalorder %s10, 1
    %p106 = por %p104, %p105
    %p107 = scmp.ne.s32.totalorder %s99, %s102
    %p108 = scmp.eq.s32.totalorder %s10, 0
    %p109 = por %p107, %p108
    %p110 = scmp.ne.s32.totalorder %s99, %s102
    %p111 = scmp.eq.s32.totalorder %s15, 1
    %p112 = por %p110, %p111
    %p113 = scmp.ne.s32.totalorder %s102, %s103
    %p114 = scmp.eq.s32.totalorder %s15, 0
    %p115 = por %p113, %p114
    %p116 = scmp.ne.s32.totalorder %s102, %s103
    %p117 = scmp.eq.s32.totalorder %s16, 1
    %p118 = por %p116, %p117
    %p120 = scmp.ne.s32.totalorder %s103, %s119
    %p121 = scmp.eq.s32.totalorder %s16, 0
    %p122 = por %p120, %p121
    %s123 = ssub.s32 %s17, %s36
    %s124 = ssub.s32 %s18, %s32
    %s125 = sor.u32 %s123, %s124
    %p126 = scmp.eq.s32.totalorder %s125, 0
    %s128 = sadd.s32 %s127, 1
    %s129 = scalar_select %p126, %s127, %s128
    %p132 = pneg %p126
    %p133 = scmp.eq.s32.totalorder %s10, 1
    %p134 = por %p132, %p133
    %p135 = scmp.ne.s32.totalorder %s127, %s130
    %p136 = scmp.eq.s32.totalorder %s10, 0
    %p137 = por %p135, %p136
    %p138 = scmp.ne.s32.totalorder %s127, %s130
    %p139 = scmp.eq.s32.totalorder %s15, 1
    %p140 = por %p138, %p139
    %p141 = scmp.ne.s32.totalorder %s130, %s131
    %p142 = scmp.eq.s32.totalorder %s15, 0
    %p143 = por %p141, %p142
    %p144 = scmp.ne.s32.totalorder %s130, %s131
    %p145 = scmp.eq.s32.totalorder %s16, 1
    %p146 = por %p144, %p145
    %p148 = scmp.ne.s32.totalorder %s131, %s147
    %p149 = scmp.eq.s32.totalorder %s16, 0
    %p150 = por %p148, %p149
    %p151 = scmp.le.s32.totalorder 1, %s10
    %p152 = scmp.lt.s32.totalorder %s10, 3
    %p153 = pnand %p151, %p152
    %p154 = pneg %p153
    // Predicated region
    $region9: #{dual_vision_loss.2} parent=5 // pred_check
      _
    $region10: #{dual_vision_loss.2} parent=5 // pred_check_branch
      %156 = sbr.rel (%p153) target = $region12
    $region11: #{dual_vision_loss.2} parent=5 // pred_region
      %s157 = ssub.s32 %s10, 1
    $region12: #{dual_vision_loss.2} parent=5 // pred_fallthru
      _
    %p158 = scmp.lt.s32.totalorder %s10, 2
    // Predicated region
    $region13: #{dual_vision_loss.2} parent=5 // pred_check
      %p159 = pneg %p158
    $region14: #{dual_vision_loss.2} parent=5 // pred_check_branch
      %161 = sbr.rel (%p159) target = $region16
    $region15: #{dual_vision_loss.2} parent=5 // pred_region
      // Predicated region
      $region17: #{dual_vision_loss.2} parent=15 // pred_check
        %p162 = pneg %p53
      $region18: #{dual_vision_loss.2} parent=15 // pred_check_branch
        %164 = sbr.rel (%p162) target = $region20
      $region19: #{dual_vision_loss.2} parent=15 // pred_region
        %p165 = scmp.lt.s32.totalorder %s17, 1
        %s166 = scalar_select %p165, %s17, 1
        %p167 = scmp.lt.s32.totalorder %s18, 0
        %s168 = scalar_select %p167, %s18, 0
        %p169 = scmp.lt.s32.totalorder %s19, 0
        %s170 = scalar_select %p169, %s19, 0
        %s171 = sadd.s32 %s170, %s168
        %s172 = sadd.s32 %s171, %s166
        %s173 = smul.addr %s172, 8
        %s174 = scalar_lea.vmem %s0, %s173
      $region20: #{dual_vision_loss.2} parent=15 // pred_fallthru
        _
      // Predicated region
      $region21: #{dual_vision_loss.2} parent=15 // pred_check
        %p175 = pneg %p81
      $region22: #{dual_vision_loss.2} parent=15 // pred_check_branch
        %177 = sbr.rel (%p175) target = $region24
      $region23: #{dual_vision_loss.2} parent=15 // pred_region
        %p178 = scmp.lt.s32.totalorder %s17, 1
        %s179 = scalar_select %p178, %s17, 1
        %p180 = scmp.lt.s32.totalorder %s18, 0
        %s181 = scalar_select %p180, %s18, 0
        %s182 = sadd.s32 %s181, %s179
        %s183 = smul.addr %s182, 8
        %s184 = scalar_lea.vmem %s1, %s183
      $region24: #{dual_vision_loss.2} parent=15 // pred_fallthru
        _
    $region16: #{dual_vision_loss.2} parent=5 // pred_fallthru
      _
    %p185 = scmp.le.s32.totalorder 1, %s10
    %p186 = scmp.lt.s32.totalorder %s10, 3
    %p187 = pnand %p185, %p186
    %p188 = pneg %p187
    // Predicated region
    $region25: #{dual_vision_loss.2} parent=5 // pred_check
      _
    $region26: #{dual_vision_loss.2} parent=5 // pred_check_branch
      %190 = sbr.rel (%p187) target = $region28
    $region27: #{dual_vision_loss.2} parent=5 // pred_region
      %s191 = ssub.s32 %s10, 1
      %p192 = scmp.lt.s32.totalorder %s20, 1
      %s193 = scalar_select %p192, %s20, 1
      %p194 = scmp.lt.s32.totalorder %s21, 0
      %s195 = scalar_select %p194, %s21, 0
      %p196 = scmp.lt.s32.totalorder %s22, 0
      %s197 = scalar_select %p196, %s22, 0
      %s198 = sadd.s32 %s197, %s195
      %s199 = sadd.s32 %s198, %s193
      %s200 = smul.addr %s199, 8
      %s201 = scalar_lea.vmem %s0, %s200
      %p202 = pneg %p59
      %p203 = pneg %p56
      %p204 = scmp.lt.s32.totalorder %s20, 1
      %s205 = scalar_select %p204, %s20, 1
      %p206 = scmp.lt.s32.totalorder %s21, 0
      %s207 = scalar_select %p206, %s21, 0
      %s208 = sadd.s32 %s207, %s205
      %s209 = smul.addr %s208, 8
      %s210 = scalar_lea.vmem %s1, %s209
      %p211 = pneg %p87
      %p212 = pneg %p84
      %p213 = pneg %p115
      %p214 = pneg %p112
      %p215 = scmp.lt.s32.totalorder %s20, 1
      %s216 = scalar_select %p215, %s20, 1
      %p217 = scmp.lt.s32.totalorder %s21, 0
      %s218 = scalar_select %p217, %s21, 0
      %s219 = sadd.s32 %s218, %s216
      %s220 = smul.addr %s219, 8
      %s221 = scalar_lea.vmem %s2, %s220
      %p222 = pneg %p143
      %p223 = pneg %p140
      %p224 = scmp.lt.s32.totalorder %s20, 1
      %s225 = scalar_select %p224, %s20, 1
      %p226 = scmp.lt.s32.totalorder %s21, 0
      %s227 = scalar_select %p226, %s21, 0
      %s228 = sadd.s32 %s227, %s225
      %s229 = smul.addr %s228, 8
      %s230 = scalar_lea.vmem %s3, %s229
      %p231 = scmp.lt.s32.totalorder %s20, 1
      %s232 = scalar_select %p231, %s20, 1
      %p233 = scmp.lt.s32.totalorder %s21, 0
      %s234 = scalar_select %p233, %s21, 0
      %p235 = scmp.lt.s32.totalorder %s22, 0
      %s236 = scalar_select %p235, %s22, 0
      %s237 = sadd.s32 %s236, %s234
      %s238 = sadd.s32 %s237, %s232
      %s239 = smul.addr %s238, 8
      %s240 = scalar_lea.vmem %s0, %s239
      %p241 = scmp.lt.s32.totalorder %s20, 1
      %s242 = scalar_select %p241, %s20, 1
      %p243 = scmp.lt.s32.totalorder %s21, 0
      %s244 = scalar_select %p243, %s21, 0
      %s245 = sadd.s32 %s244, %s242
      %s246 = smul.addr %s245, 8
      %s247 = scalar_lea.vmem %s1, %s246
      %p248 = scmp.lt.s32.totalorder %s20, 1
      %s249 = scalar_select %p248, %s20, 1
      %p250 = scmp.lt.s32.totalorder %s21, 0
      %s251 = scalar_select %p250, %s21, 0
      %s252 = sadd.s32 %s251, %s249
      %s253 = smul.addr %s252, 8
      %s254 = scalar_lea.vmem %s2, %s253
      %p255 = scmp.lt.s32.totalorder %s20, 1
      %s256 = scalar_select %p255, %s20, 1
      %p257 = scmp.lt.s32.totalorder %s21, 0
      %s258 = scalar_select %p257, %s21, 0
      %s259 = sadd.s32 %s258, %s256
      %s260 = smul.addr %s259, 8
      %s261 = scalar_lea.vmem %s3, %s260
      %p262 = scmp.eq.s32.totalorder %s22, 0
      // Predicated region
      $region29: #{dual_vision_loss.2} parent=27 // pred_check
        %p263 = pneg %p262
      $region30: #{dual_vision_loss.2} parent=27 // pred_check_branch
        %265 = sbr.rel (%p263) target = $region32
      $region31: #{dual_vision_loss.2} parent=27 // pred_region
        %vm266 = vcmask 7168
        %267 = vst.msk [vmem:[#allocation2] sm:$0xff] %vm266, -inf
        %268 = vst.msk [vmem:[#allocation3] sm:$0xff] %vm266, 0.0
        %269 = vst.msk [vmem:[#allocation4] sm:$0xff] %vm266, 0.0
      $region32: #{dual_vision_loss.2} parent=27 // pred_fallthru
        _
      %v270 = vld [vmem:[%s240] sm:$0xff]
      %v271 = vld [vmem:[%s247] sm:$0xff]
      %s272 = smul.u32 %s22, 128
      %v273 = vlaneseq
      %v274 = vand.u32 %v273, 127
      %v275 = vstv %s272
      %v276 = vadd.s32 %v275, %v274
      %vm277 = vcmp.lt.s32.totalorder %v276, 128
      %v278 = vsel %vm277, %v270, -inf
      %v279 = vld [vmem:[#allocation2] sm:$0xff]
      %280 = vmax.xlane.f32.xlu0 %v278
      %v281 = vpop.xlane.xlu0 %280
      %v282 = vmax.f32 %v279, %v281
      %v283 = vsub.f32 %v279, %v282
      %v284 = vmul.f32 %v283, 1.442695
      %v285 = vpow.pop %v284
      %v286 = vld [vmem:[#allocation3] sm:$0xff]
      %v287 = vmul.f32 %v286, %v285
      %289 = vset.pattern.permute.xlu0 0
      %290 = vperm.xlu0 %289, %v282
      %v291 = vpop.permute.xlu0 %290
      %v293 = vsub.f32 %v278, %v291
      %v294 = vmul.f32 %v293, 1.442695
      %v295 = vpow.pop %v294
      %296 = vadd.xlane.f32.xlu0 %v295
      %v297 = vpop.xlane.xlu0 %296
      %v298 = vadd.f32 %v287, %v297
      %vm299 = vcmask 7168
      %300 = vst.msk [vmem:[#allocation3] sm:$0xff] %vm299, %v298
      %301 = vst.msk [vmem:[#allocation2] sm:$0xff] %vm299, %v282
      %v302 = vld [vmem:[#allocation4] sm:$0xff]
      %303 = vset.pattern.permute.xlu0 0
      %304 = vperm.xlu0 %303, %v271
      %v305 = vpop.permute.xlu0 %304
      %vm306 = vcmp.eq.s32.totalorder %v276, %v305
      %v307 = vsel %vm306, %v270, 0.0
      %308 = vadd.xlane.f32.xlu0 %v307
      %v309 = vpop.xlane.xlu0 %308
      %v310 = vadd.f32 %v302, %v309
      %311 = vst.msk [vmem:[#allocation4] sm:$0xff] %vm299, %v310
      // Predicated region
      $region33: #{dual_vision_loss.2} parent=27 // pred_check
        %p312 = pneg %p262
      $region34: #{dual_vision_loss.2} parent=27 // pred_check_branch
        %314 = sbr.rel (%p312) target = $region36
      $region35: #{dual_vision_loss.2} parent=27 // pred_region
        %v315 = vld [vmem:[#allocation2] sm:$0xff]
        %v316 = vld [vmem:[#allocation3] sm:$0xff]
        %v317 = vlog2.pop %v316
        %v318 = vmul.f32 %v317, 0.6931472
        %v319 = vadd.f32 %v315, %v318
        %vm320 = vcmp.ne.s32.totalorder %v271, 4294967196
        %v321 = vld [vmem:[#allocation4] sm:$0xff]
        %v322 = vsub.f32 %v319, %v321
        %v323 = vsel %vm320, %v322, 0.0
        %324 = vst.msk [vmem:[%s254] sm:$0xff] %vm299, %v323
        %v325 = vsel %vm320, 1, 0
        %v326 = vcvt.s32.f32 %v325
        %327 = vst.msk [vmem:[%s261] sm:$0xff] %vm299, %v326
      $region36: #{dual_vision_loss.2} parent=27 // pred_fallthru
        _
      %p328 = scmp.lt.s32.totalorder %s20, 1
      %s329 = scalar_select %p328, %s20, 1
      %p330 = scmp.lt.s32.totalorder %s21, 0
      %s331 = scalar_select %p330, %s21, 0
      %s332 = sadd.s32 %s331, %s329
      %s333 = smul.addr %s332, 8
      %s334 = scalar_lea.vmem %s2, %s333
      %p335 = scmp.lt.s32.totalorder %s20, 1
      %s336 = scalar_select %p335, %s20, 1
      %p337 = scmp.lt.s32.totalorder %s21, 0
      %s338 = scalar_select %p337, %s21, 0
      %s339 = sadd.s32 %s338, %s336
      %s340 = smul.addr %s339, 8
      %s341 = scalar_lea.vmem %s3, %s340
      // Predicated region
      $region37: #{dual_vision_loss.2} parent=27 // pred_check
        %p342 = pneg %p112
      $region38: #{dual_vision_loss.2} parent=27 // pred_check_branch
        %344 = sbr.rel (%p342) target = $region40
      $region39: #{dual_vision_loss.2} parent=27 // pred_region
        _
      $region40: #{dual_vision_loss.2} parent=27 // pred_fallthru
        _
      // Predicated region
      $region41: #{dual_vision_loss.2} parent=27 // pred_check
        %p345 = pneg %p140
      $region42: #{dual_vision_loss.2} parent=27 // pred_check_branch
        %347 = sbr.rel (%p345) target = $region44
      $region43: #{dual_vision_loss.2} parent=27 // pred_region
        _
      $region44: #{dual_vision_loss.2} parent=27 // pred_fallthru
        _
    $region28: #{dual_vision_loss.2} parent=5 // pred_fallthru
      _
    %p348 = scmp.le.s32.totalorder 2, %s10
    // Predicated region
    $region45: #{dual_vision_loss.2} parent=5 // pred_check
      %p349 = pneg %p348
    $region46: #{dual_vision_loss.2} parent=5 // pred_check_branch
      %351 = sbr.rel (%p349) target = $region48
    $region47: #{dual_vision_loss.2} parent=5 // pred_region
      %s352 = ssub.s32 %s10, 2
      // Predicated region
      $region49: #{dual_vision_loss.2} parent=47 // pred_check
        %p353 = pneg %p118
      $region50: #{dual_vision_loss.2} parent=47 // pred_check_branch
        %355 = sbr.rel (%p353) target = $region52
      $region51: #{dual_vision_loss.2} parent=47 // pred_region
        %p356 = scmp.lt.s32.totalorder %s23, 1
        %s357 = scalar_select %p356, %s23, 1
        %p358 = scmp.lt.s32.totalorder %s24, 0
        %s359 = scalar_select %p358, %s24, 0
        %s360 = sadd.s32 %s359, %s357
        %s361 = smul.addr %s360, 8
        %s362 = scalar_lea.vmem %s2, %s361
      $region52: #{dual_vision_loss.2} parent=47 // pred_fallthru
        _
      // Predicated region
      $region53: #{dual_vision_loss.2} parent=47 // pred_check
        %p363 = pneg %p146
      $region54: #{dual_vision_loss.2} parent=47 // pred_check_branch
        %365 = sbr.rel (%p363) target = $region56
      $region55: #{dual_vision_loss.2} parent=47 // pred_region
        %p366 = scmp.lt.s32.totalorder %s23, 1
        %s367 = scalar_select %p366, %s23, 1
        %p368 = scmp.lt.s32.totalorder %s24, 0
        %s369 = scalar_select %p368, %s24, 0
        %s370 = sadd.s32 %s369, %s367
        %s371 = smul.addr %s370, 8
        %s372 = scalar_lea.vmem %s3, %s371
      $region56: #{dual_vision_loss.2} parent=47 // pred_fallthru
        _
    $region48: #{dual_vision_loss.2} parent=5 // pred_fallthru
      _
  $region6: #{dual_vision_loss.2} parent=0 // loop_footer
    %s14 = sadd.s32 1, %s10
  $region7: #{dual_vision_loss.2} parent=0 // loop_footer_branch
    %9 = sbr.rel target = $region3
  $region8: #{dual_vision_loss.2} parent=0 // loop_exit
    _

// kernel: dual_vision_loss.3
$region0: #{dual_vision_loss.3}
  #allocation0 [shape = 'u32[]', space=smem, size = 0x4, offset = 0x4, fixed_abs, tag = 'smem constant byte address 0x4 - core index']
  #allocation1 [shape = 'u32[144,128]{1,0:T(1,128)}', space=vmem, size = 0x12000, scoped, tag = 'internal scratch']
  %s0 = inlined_call_operand.vmem [shape: f32[2,16], index: 0, kind: input, shape index: {}]
  %s1 = inlined_call_operand.vmem [shape: f32[2,16,32], index: 1, kind: input, shape index: {}]
  %s2 = inlined_call_operand.vmem [shape: f32[2,32], index: 2, kind: input, shape index: {}]
  %s3 = inlined_call_operand.vmem [shape: f32[3], index: 3, kind: output, shape index: {}]
  %s4 = sld [smem:[#allocation0]]
  $region22: #{dual_vision_loss.3} parent=0
    _
  %s6 = ssub.s32 1, %s4
  %s7 = scalar_select 0, %s6, %s4
  $region1: #{dual_vision_loss.3} parent=0
    #allocation2 [shape = 'u8[512]{0}', space=smem, size = 0x200, scoped, tag = 'output window, operand 0, single buffered']
    #allocation3 [shape = 's32[1]{0}', space=sflag, size = 0x4, scoped, tag = 'scoped memory for dual_vision_loss.3']
    %8 = vsyncpa [#allocation3], 0
    // Predicated region
    $region2: #{dual_vision_loss.3} parent=1 // pred_check
      _
    $region3: #{dual_vision_loss.3} parent=1 // pred_check_branch
      %10 = sbr.rel (0) target = $region5
    $region4: #{dual_vision_loss.3} parent=1 // pred_region
      _
    $region5: #{dual_vision_loss.3} parent=1 // pred_fallthru
      _
    // Predicated region
    $region6: #{dual_vision_loss.3} parent=1 // pred_check
      _
    $region7: #{dual_vision_loss.3} parent=1 // pred_check_branch
      %12 = sbr.rel (0) target = $region9
    $region8: #{dual_vision_loss.3} parent=1 // pred_region
      _
    $region9: #{dual_vision_loss.3} parent=1 // pred_fallthru
      _
    // Predicated region
    $region10: #{dual_vision_loss.3} parent=1 // pred_check
      _
    $region11: #{dual_vision_loss.3} parent=1 // pred_check_branch
      %14 = sbr.rel (0) target = $region13
    $region12: #{dual_vision_loss.3} parent=1 // pred_region
      _
    $region13: #{dual_vision_loss.3} parent=1 // pred_fallthru
      _
    %v15 = vld [vmem:[%s0] sm:$0x3]
    %v16 = vadd.f32 %v15, 1e-08
    %v17 = vlog2.pop %v16
    %v18 = vmul.f32 %v17, 0.6931472
    %v19 = vmul.f32 %v15, %v18
    %v20 = vsub.f32 1.0, %v15
    %v21 = vadd.f32 %v20, 1e-08
    %v22 = vlog2.pop %v21
    %v23 = vmul.f32 %v22, 0.6931472
    %v24 = vmul.f32 %v20, %v23
    %v25 = vadd.f32 %v19, %v24
    %v26 = vsub.f32 0.0, %v25
    %vm27 = vcmask 123904
    %v28 = vsel %vm27, %v26, 0.0
    %29 = vadd.xlane.f32.xlu0 %v28
    %v30 = vpop.xlane.xlu0 %29
    %v31 = vrot.slane %v30, 4
    %v32 = vadd.f32 %v30, %v31
    %v33 = vrot.slane %v32, 2
    %v34 = vadd.f32 %v32, %v33
    %v35 = vrot.slane %v34, 1
    %v36 = vadd.f32 %v34, %v35
    %s37 = vtos %v36
    %s38 = ssub.f32 0.0, %s37
    %v39 = vrcp.pop 32.0
    %s40 = vtos %v39
    %s41 = smul.f32 %s38, %s40
    %s42 = scalar_lea.smem [#allocation2], 0
    %43 = sst [smem:[%s42]] %s41
    %v44 = vsel %vm27, %v15, 0.0
    %45 = vadd.xlane.f32.xlu0 %v44
    %v46 = vpop.xlane.xlu0 %45
    %v47 = vrot.slane %v46, 4
    %v48 = vadd.f32 %v46, %v47
    %v49 = vrot.slane %v48, 2
    %v50 = vadd.f32 %v48, %v49
    %v51 = vrot.slane %v50, 1
    %v52 = vadd.f32 %v50, %v51
    %s53 = vtos %v52
    %v54 = vrcp.pop 32.0
    %s55 = vtos %v54
    %s56 = smul.f32 %s53, %s55
    %v57 = vstv %s56
    %v58 = vsub.f32 %v15, %v57
    %v59 = vmul.f32 %v58, %v58
    %v60 = vsel %vm27, %v59, 0.0
    %61 = vadd.xlane.f32.xlu0 %v60
    %v62 = vpop.xlane.xlu0 %61
    %v63 = vrot.slane %v62, 4
    %v64 = vadd.f32 %v62, %v63
    %v65 = vrot.slane %v64, 2
    %v66 = vadd.f32 %v64, %v65
    %v67 = vrot.slane %v66, 1
    %v68 = vadd.f32 %v66, %v67
    %s69 = vtos %v68
    %v70 = vrcp.pop 31.0
    %s71 = vtos %v70
    %s72 = smul.f32 %s69, %s71
    %s73 = scalar_lea.smem [#allocation2], 1
    %74 = sst [smem:[%s73]] %s72
    %v75 = vld [vmem:[%s1] sm:$0xff]
    %v76 = vld [vmem:[%s1 + $0x8] sm:$0xff]
    %v77 = vld [vmem:[%s1 + $0x10] sm:$0xff]
    %v78 = vld [vmem:[%s1 + $0x18] sm:$0xff]
    %v79 = vld [vmem:[%s2] sm:$0x3]
    %vm80 = vcmask 261120
    %v81 = vsel %vm80, %v75, 0.0
    %v82 = vsel %vm80, %v76, 0.0
    %v83 = vadd.f32 %v81, %v82
    %v84 = vrot.slane %v83, 4
    %v85 = vadd.f32 %v83, %v84
    %v86 = vrot.slane %v85, 2
    %v87 = vadd.f32 %v85, %v86
    %v88 = vrot.slane %v87, 1
    %v89 = vadd.f32 %v87, %v88
    %v90 = vsel %vm80, %v77, 0.0
    %v91 = vsel %vm80, %v78, 0.0
    %v92 = vadd.f32 %v90, %v91
    %v93 = vrot.slane %v92, 4
    %v94 = vadd.f32 %v92, %v93
    %v95 = vrot.slane %v94, 2
    %v96 = vadd.f32 %v94, %v95
    %v97 = vrot.slane %v96, 1
    %v98 = vadd.f32 %v96, %v97
    %v99 = vrcp.pop 16.0
    %v100 = vmul.f32 %v89, %v99
    %v101 = vmul.f32 %v98, %v99
    %v102 = vmul.f32 %v100, %v100
    %v103 = vmul.f32 %v101, %v101
    %vm106 = vcmask 1041409
    %v107 = vsel %vm106, %v103, %v102
    %vm109 = vcmask 254976
    %v110 = vsel %vm109, %v107, 0.0
    %111 = vadd.xlane.f32.xlu0 %v110
    %v112 = vpop.xlane.xlu0 %111
    %v113 = vrsqrt.pop %v112
    %v114 = vmul.f32 %v112, %v113
    %vm115 = vcmp.eq.f32.partialorder %v112, inf
    %v116 = vsel %vm115, %v112, %v114
    %vm117 = vcmp.eq.f32.partialorder %v112, 0.0
    %v118 = vand.u32 %v112, 2147483648
    %v119 = vsel %vm117, %v118, %v116
    %v120 = vmax.f32 %v119, 1e-12
    %v122 = vrot.slane %v120, 1
    %v125 = vrcp.pop %v120
    %v126 = vmul.f32 %v100, %v125
    %v127 = vrcp.pop %v122
    %v128 = vmul.f32 %v101, %v127
    %v129 = vmul.f32 %v79, %v79
    %v130 = vsel %vm109, %v129, 0.0
    %131 = vadd.xlane.f32.xlu0 %v130
    %v132 = vpop.xlane.xlu0 %131
    %v133 = vrsqrt.pop %v132
    %v134 = vmul.f32 %v132, %v133
    %vm135 = vcmp.eq.f32.partialorder %v132, inf
    %v136 = vsel %vm135, %v132, %v134
    %vm137 = vcmp.eq.f32.partialorder %v132, 0.0
    %v138 = vand.u32 %v132, 2147483648
    %v139 = vsel %vm137, %v138, %v136
    %v140 = vmax.f32 %v139, 1e-12
    %v141 = vrcp.pop %v140
    %v142 = vmul.f32 %v79, %v141
    %v145 = vrot.slane %v128, 7
    %v146 = vsel %vm106, %v145, %v126
    %v147 = vsel %vm80, %v146, 0
    %v150 = vsel %vm80, %v142, 0
    %152 = vmatprep.subr.mxu0 0.0
    %153 = vmatpush1.xpose.msra.mxu0 0.0
    %154 = vmatprep.subr.mxu0 0.0
    %155 = vmatpush1.xpose.msra.mxu0 0.0
    %156 = vmatprep.subr.mxu0 0.0
    %157 = vmatpush1.xpose.msra.mxu0 0.0
    %158 = vmatprep.subr.mxu0 0.0
    %159 = vmatpush1.xpose.msra.mxu0 0.0
    %160 = vmatprep.subr.mxu0 0.0
    %161 = vmatpush1.xpose.msra.mxu0 0.0
    %162 = vmatprep.subr.mxu0 0.0
    %163 = vmatpush1.xpose.msra.mxu0 0.0
    %164 = vmatprep.subr.mxu0 0.0
    %165 = vmatpush1.xpose.msra.mxu0 0.0
    %166 = vmatprep.subr.mxu0 0.0
    %167 = vmatpush1.xpose.msra.mxu0 0.0
    %168 = vmatprep.subr.mxu0 0.0
    %169 = vmatpush1.xpose.msra.mxu0 0.0
    %170 = vmatprep.subr.mxu0 0.0
    %171 = vmatpush1.xpose.msra.mxu0 0.0
    %172 = vmatprep.subr.mxu0 0.0
    %173 = vmatpush1.xpose.msra.mxu0 0.0
    %174 = vmatprep.subr.mxu0 0.0
    %175 = vmatpush1.xpose.msra.mxu0 0.0
    %176 = vmatprep.subr.mxu0 0.0
    %177 = vmatpush1.xpose.msra.mxu0 0.0
    %178 = vmatprep.subr.mxu0 0.0
    %179 = vmatpush1.xpose.msra.mxu0 0.0
    %180 = vmatprep.subr.mxu0 0.0
    %181 = vmatpush1.xpose.msra.mxu0 0.0
    %182 = vmatprep.subr.mxu0 0.0
    %183 = vmatpush1.xpose.msra.mxu0 %v150
    %184 = vmatprep.subr.mxu0 0.0
    %185 = vmatpush2.xpose.msra.mxu0 0.0
    %186 = vmatprep.subr.mxu0 0.0
    %187 = vmatpush2.xpose.msra.mxu0 0.0
    %188 = vmatprep.subr.mxu0 0.0
    %189 = vmatpush2.xpose.msra.mxu0 0.0
    %190 = vmatprep.subr.mxu0 0.0
    %191 = vmatpush2.xpose.msra.mxu0 0.0
    %192 = vmatprep.subr.mxu0 0.0
    %193 = vmatpush2.xpose.msra.mxu0 0.0
    %194 = vmatprep.subr.mxu0 0.0
    %195 = vmatpush2.xpose.msra.mxu0 0.0
    %196 = vmatprep.subr.mxu0 0.0
    %197 = vmatpush2.xpose.msra.mxu0 0.0
    %198 = vmatprep.subr.mxu0 0.0
    %199 = vmatpush2.xpose.msra.mxu0 0.0
    %200 = vmatprep.subr.mxu0 0.0
    %201 = vmatpush2.xpose.msra.mxu0 0.0
    %202 = vmatprep.subr.mxu0 0.0
    %203 = vmatpush2.xpose.msra.mxu0 0.0
    %204 = vmatprep.subr.mxu0 0.0
    %205 = vmatpush2.xpose.msra.mxu0 0.0
    %206 = vmatprep.subr.mxu0 0.0
    %207 = vmatpush2.xpose.msra.mxu0 0.0
    %208 = vmatprep.subr.mxu0 0.0
    %209 = vmatpush2.xpose.msra.mxu0 0.0
    %210 = vmatprep.subr.mxu0 0.0
    %211 = vmatpush2.xpose.msra.mxu0 0.0
    %212 = vmatprep.subr.mxu0 0.0
    %213 = vmatpush2.xpose.msra.mxu0 0.0
    %214 = vmatprep.subr.mxu0 0.0
    %215 = vmatpush2.xpose.msra.mxu0 0.0
    %216 = vmatprep.mubr.f32.mxu0 0.0
    %217 = vmatmul.mubr.f32.gmra.mxu0 %v147
    %v218 = vpop.f32.mrf.mxu0
    %v219 = vadd.f32 0.0, %v218
    %v220 = vpop.f32.mrf.mxu0
    %221 = vdwg.mxu0
    %v222 = vrcp.pop 0.07
    %v223 = vmul.f32 %v219, %v222
    %v224 = vlaneseq
    %v225 = vshrl.u32 %v224, 7
    %v226 = vlaneseq
    %v227 = vand.u32 %v226, 127
    %vm228 = vcmp.eq.s32.totalorder %v225, %v227
    %v229 = vsel %vm228, %v223, 0.0
    %vm230 = vcmask 9216
    %v231 = vsel %vm230, %v229, 0.0
    %232 = vadd.xlane.f32.xlu0 %v231
    %v233 = vpop.xlane.xlu0 %232
    %v234 = vrot.slane %v231, 4
    %v235 = vadd.f32 %v231, %v234
    %v236 = vrot.slane %v235, 2
    %v237 = vadd.f32 %v235, %v236
    %v238 = vrot.slane %v237, 1
    %v239 = vadd.f32 %v237, %v238
    %v240 = vsel %vm230, %v223, -inf
    %241 = vmax.xlane.f32.xlu0 %v240
    %v242 = vpop.xlane.xlu0 %241
    %v243 = vsub.f32 %v223, %v242
    %v244 = vmul.f32 %v243, 1.442695
    %v245 = vpow.pop %v244
    %v246 = vsel %vm230, %v245, 0.0
    %247 = vadd.xlane.f32.xlu0 %v246
    %v248 = vpop.xlane.xlu0 %247
    %v249 = vlog2.pop %v248
    %v250 = vmul.f32 %v249, 0.6931472
    %v251 = vadd.f32 %v242, %v250
    %v252 = vrot.slane %v240, 4
    %v253 = vmax.f32 %v240, %v252
    %v254 = vrot.slane %v253, 2
    %v255 = vmax.f32 %v253, %v254
    %v256 = vrot.slane %v255, 1
    %v257 = vmax.f32 %v255, %v256
    %v258 = vsub.f32 %v223, %v257
    %v259 = vmul.f32 %v258, 1.442695
    %v260 = vpow.pop %v259
    %v261 = vsel %vm230, %v260, 0.0
    %v262 = vrot.slane %v261, 4
    %v263 = vadd.f32 %v261, %v262
    %v264 = vrot.slane %v263, 2
    %v265 = vadd.f32 %v263, %v264
    %v266 = vrot.slane %v265, 1
    %v267 = vadd.f32 %v265, %v266
    %v268 = vlog2.pop %v267
    %v269 = vmul.f32 %v268, 0.6931472
    %v270 = vadd.f32 %v257, %v269
    %v271 = vsub.f32 %v251, %v233
    %vm272 = vcmask 1024
    %v273 = vsel %vm272, %v271, 0.0
    %274 = vadd.xlane.f32.xlu0 %v273
    %v275 = vpop.xlane.xlu0 %274
    %v276 = vrot.slane %v275, 4
    %v277 = vadd.f32 %v275, %v276
    %v278 = vrot.slane %v277, 2
    %v279 = vadd.f32 %v277, %v278
    %v280 = vrot.slane %v279, 1
    %v281 = vadd.f32 %v279, %v280
    %s282 = vtos %v281
    %v283 = vrcp.pop 2.0
    %s284 = vtos %v283
    %s285 = smul.f32 %s282, %s284
    %v286 = vsub.f32 %v270, %v239
    %vm287 = vcmask 8192
    %v288 = vsel %vm287, %v286, 0.0
    %289 = vadd.xlane.f32.xlu0 %v288
    %v290 = vpop.xlane.xlu0 %289
    %v291 = vrot.slane %v290, 4
    %v292 = vadd.f32 %v290, %v291
    %v293 = vrot.slane %v292, 2
    %v294 = vadd.f32 %v292, %v293
    %v295 = vrot.slane %v294, 1
    %v296 = vadd.f32 %v294, %v295
    %s297 = vtos %v296
    %v298 = vrcp.pop 2.0
    %s299 = vtos %v298
    %s300 = smul.f32 %s297, %s299
    %s301 = sadd.f32 %s285, %s300
    %s302 = smul.f32 %s301, 0.5
    %s303 = scalar_lea.smem [#allocation2], 2
    %304 = sst [smem:[%s303]] %s302
    // Predicated region
    $region14: #{dual_vision_loss.3} parent=1 // pred_check
      _
    $region15: #{dual_vision_loss.3} parent=1 // pred_check_branch
      %306 = sbr.rel (0) target = $region17
    $region16: #{dual_vision_loss.3} parent=1 // pred_region
      %s308 = ssub.s32 16, 16
      %309 = vsyncadd [#allocation3], %s308
      %s311 = sshll.u32 %s3, 4
      %s312 = int_to_ptr.vmem [resolvable:$true] %s311
      %314 = dma.smem_to_vmem [#allocation2], 16, %s312, [#allocation3]
    $region17: #{dual_vision_loss.3} parent=1 // pred_fallthru
      _
    // Predicated region
    $region18: #{dual_vision_loss.3} parent=1 // pred_check
      _
    $region19: #{dual_vision_loss.3} parent=1 // pred_check_branch
      %316 = sbr.rel (0) target = $region21
    $region20: #{dual_vision_loss.3} parent=1 // pred_region
      %317 = dma.done [#allocation3], 16
    $region21: #{dual_vision_loss.3} parent=1 // pred_fallthru
      _
    %318 = sfence
    %319 = vsyncpa [#allocation3], 1

</llo_original>
